<compile_context>
chip_gen: v6e
topology: v6e:2x2x1
jax: 0.10.0
libtpu: 0.0.40
codegen_flags: <defaults>
</compile_context>

<pallas_src>
import functools

import jax
import jax.numpy as jnp
from jax.experimental import pallas as pl
from jax.experimental.pallas import tpu as pltpu


def _depth_conv_kernel(x_ref, m_ref, w_ref, b_ref, o_ref, *, width):
    # x_ref : (1, Cin, H*W)    channel-major input, spatial flattened on lanes
    # m_ref : (9, H*W)         per-tap zero-padding validity masks (f32)
    # w_ref : (Cout, 9*Cin)    fused weights  w[co, t*Cin+ci] = dw[dy,dx,ci]*pw[ci,co]
    # b_ref : (Cout, 1)        fused bias     db @ pw + pb
    # o_ref : (1, Cout, H*W)   channel-major output (lane-dense last dim)
    hw = x_ref.shape[2]

    x = x_ref[0].astype(jnp.float32)          # (Cin, HW) — cast once, outside the tap loop
    m = m_ref[...]                            # (9, HW) f32

    # im2col: 9 shifted-and-masked copies of x stacked along the sublane axis.
    # Shifts are lane rotations (XLU); zero padding comes from the masks (VPU).
    parts = []
    for dy in range(3):
        for dx in range(3):
            t = dy * 3 + dx
            s = (dy - 1) * width + (dx - 1)   # flattened source offset for this tap
            if s == 0:
                shifted = x
            else:
                shifted = pltpu.roll(x, shift=(-s) % hw, axis=1)
            parts.append(shifted * m[t:t + 1, :])
    patch = jnp.concatenate(parts, axis=0)    # (9*Cin, HW)

    # Single MXU matmul: (Cout, 9*Cin) @ (9*Cin, HW);  N = HW is a multiple of 128.
    y = jnp.dot(w_ref[...].astype(jnp.float32), patch,
                preferred_element_type=jnp.float32)          # (Cout, HW)
    y = y + b_ref[...].astype(jnp.float32)                   # (Cout, 1) broadcast
    o_ref[0] = y.astype(o_ref.dtype)


def depth_conv_pallas(x_nchw, dw, db, pw, pb):
    """x_nchw: (B, Cin, H, W).  dw: (3,3,Cin), db: (Cin,), pw: (Cin,Cout), pb: (Cout,).
    Returns (B, Cout, H, W), matching the torch module."""
    B, Cin, H, W = x_nchw.shape
    Cout = pw.shape[1]
    HW = H * W

    # Free contiguous reshape — stays channel-major (NCHW), no transpose, no pad.
    x_flat = x_nchw.reshape(B, Cin, HW)

    # Fold the depthwise conv into the pointwise matmul:
    #   out[co] = sum_{t,ci} x_shift[t,ci] * dw[t,ci] * pw[ci,co] + (db @ pw + pb)[co]
    dw9 = dw.reshape(9, Cin).astype(jnp.float32)                            # (9, Cin)
    w_fused = dw9[:, :, None] * pw.astype(jnp.float32)[None, :, :]          # (9, Cin, Cout)
    w_fused = w_fused.reshape(9 * Cin, Cout).T                              # (Cout, 9*Cin)
    b_fused = (db.astype(jnp.float32) @ pw.astype(jnp.float32)
               + pb.astype(jnp.float32)).reshape(Cout, 1)                   # (Cout, 1)

    # Per-tap validity masks: zero padding handled in-kernel, not via jnp.pad.
    hh = jnp.arange(H).reshape(H, 1)
    ww = jnp.arange(W).reshape(1, W)
    masks = []
    for dy in range(3):
        for dx in range(3):
            ok_h = (hh + (dy - 1) >= 0) & (hh + (dy - 1) < H)
            ok_w = (ww + (dx - 1) >= 0) & (ww + (dx - 1) < W)
            masks.append((ok_h & ok_w).astype(jnp.float32).reshape(1, HW))
    mask = jnp.concatenate(masks, axis=0)                                   # (9, HW)

    kernel = functools.partial(_depth_conv_kernel, width=W)

    out_flat = pl.pallas_call(
        kernel,
        out_shape=jax.ShapeDtypeStruct((B, Cout, HW), x_nchw.dtype),
        grid_spec=pltpu.PrefetchScalarGridSpec(
            num_scalar_prefetch=0,
            grid=(B,),
            in_specs=[
                pl.BlockSpec((1, Cin, HW), lambda b: (b, 0, 0)),
                pl.BlockSpec((9, HW), lambda b: (0, 0)),
                pl.BlockSpec((Cout, 9 * Cin), lambda b: (0, 0)),
                pl.BlockSpec((Cout, 1), lambda b: (0, 0)),
            ],
            out_specs=pl.BlockSpec((1, Cout, HW), lambda b: (b, 0, 0)),
        ),
        compiler_params=pltpu.CompilerParams(
            dimension_semantics=("parallel",),
        ),
    )(x_flat, mask, w_fused, b_fused)

    return out_flat.reshape(B, Cout, H, W)


def _reference(x, dw, db, pw, pb):
    """Pure-JAX reference with identical semantics to the torch module."""
    B, Cin, H, W = x.shape
    xp = jnp.pad(x, ((0, 0), (0, 0), (1, 1), (1, 1)))
    d = jnp.zeros((B, Cin, H, W), jnp.float32)
    for dy in range(3):
        for dx in range(3):
            d = d + xp[:, :, dy:dy + H, dx:dx + W].astype(jnp.float32) \
                    * dw[dy, dx, :][None, :, None, None]
    d = d + db[None, :, None, None]
    return jnp.einsum('bchw,co->bohw', d, pw) + pb[None, :, None, None]


if __name__ == "__main__":
    # Small shapes consistent with the module: B=2, in_ch=4, out_ch=8, H=W=16.
    B, Cin, Cout, H, W = 2, 4, 8, 16, 16

    key = jax.random.PRNGKey(0)
    kx, k1, k2, k3, k4 = jax.random.split(key, 5)

    x = jax.random.normal(kx, (B, Cin, H, W), dtype=jnp.float32)

    # Parameter convention (shapes match nn.Conv2d params of the module):
    #   depth_conv.weight: (Cin, 1, 3, 3) -> stored here as (3, 3, Cin)
    #   depth_conv.bias  : (Cin,)
    #   point_conv.weight: (Cout, Cin, 1, 1) -> stored here as (Cin, Cout)
    #   point_conv.bias  : (Cout,)
    dw = jax.random.normal(k1, (3, 3, Cin), dtype=jnp.float32) * 0.1
    db = jax.random.normal(k2, (Cin,), dtype=jnp.float32) * 0.1
    pw = jax.random.normal(k3, (Cin, Cout), dtype=jnp.float32) * 0.1
    pb = jax.random.normal(k4, (Cout,), dtype=jnp.float32) * 0.1

    out = depth_conv_pallas(x, dw, db, pw, pb)
    jax.block_until_ready(out)
    assert out.shape == (B, Cout, H, W)

    ref = _reference(x, dw, db, pw, pb)
    assert jnp.allclose(out, ref, rtol=2e-4, atol=2e-4), \
        f"max abs err = {jnp.max(jnp.abs(out - ref))}"

    print("KERNEL_OK")
</pallas_src>

<mosaic_0001>
module attributes {stable_mosaic.version = 11 : i64} {
  func.func @_depth_conv_kernel(%arg0: i32, %arg1: memref<1x4x256xf32, #tpu.memory_space<vmem>>, %arg2: memref<9x256xf32, #tpu.memory_space<vmem>>, %arg3: memref<8x36xf32, #tpu.memory_space<vmem>>, %arg4: memref<8x1xf32, #tpu.memory_space<vmem>>, %arg5: memref<1x8x256xf32, #tpu.memory_space<vmem>>) attributes {dimension_semantics = [#tpu.dimension_semantics<parallel>], iteration_bounds = array<i64: 2>, scalar_prefetch = 0 : i64, scratch_operands = 0 : i64, tpu.core_type = #tpu.core_type<tc>, window_params = [{transform_indices = @transform_0, window_bounds = array<i64: 1, 4, 256>}, {pipeline_mode = #tpu.pipeline_mode<synchronous>, transform_indices = @transform_1, window_bounds = array<i64: 9, 256>}, {pipeline_mode = #tpu.pipeline_mode<synchronous>, transform_indices = @transform_2, window_bounds = array<i64: 8, 36>}, {pipeline_mode = #tpu.pipeline_mode<synchronous>, transform_indices = @transform_3, window_bounds = array<i64: 8, 1>}, {transform_indices = @transform_4, window_bounds = array<i64: 1, 8, 256>}]} {
    %c0 = arith.constant 0 : index
    %c0_0 = arith.constant 0 : index
    %c0_1 = arith.constant 0 : index
    %0 = vector.load %arg1[%c0, %c0_0, %c0_1] : memref<1x4x256xf32, #tpu.memory_space<vmem>>, vector<1x4x256xf32>
    %1 = vector.shape_cast %0 : vector<1x4x256xf32> to vector<4x256xf32>
    %c0_2 = arith.constant 0 : index
    %c0_3 = arith.constant 0 : index
    %2 = vector.load %arg2[%c0_2, %c0_3] : memref<9x256xf32, #tpu.memory_space<vmem>>, vector<9x256xf32>
    %c17_i32 = arith.constant 17 : i32
    %3 = tpu.dynamic_rotate %1 by %c17_i32 dim 1 : vector<4x256xf32>, i32 -> vector<4x256xf32>
    %4 = vector.extract_strided_slice %2 {offsets = [0, 0], sizes = [1, 256], strides = [1, 1]} : vector<9x256xf32> to vector<1x256xf32>
    %5 = vector.broadcast %4 : vector<1x256xf32> to vector<4x256xf32>
    %6 = arith.mulf %3, %5 : vector<4x256xf32>
    %c16_i32 = arith.constant 16 : i32
    %7 = tpu.dynamic_rotate %1 by %c16_i32 dim 1 : vector<4x256xf32>, i32 -> vector<4x256xf32>
    %8 = vector.extract_strided_slice %2 {offsets = [1, 0], sizes = [1, 256], strides = [1, 1]} : vector<9x256xf32> to vector<1x256xf32>
    %9 = vector.broadcast %8 : vector<1x256xf32> to vector<4x256xf32>
    %10 = arith.mulf %7, %9 : vector<4x256xf32>
    %c15_i32 = arith.constant 15 : i32
    %11 = tpu.dynamic_rotate %1 by %c15_i32 dim 1 : vector<4x256xf32>, i32 -> vector<4x256xf32>
    %12 = vector.extract_strided_slice %2 {offsets = [2, 0], sizes = [1, 256], strides = [1, 1]} : vector<9x256xf32> to vector<1x256xf32>
    %13 = vector.broadcast %12 : vector<1x256xf32> to vector<4x256xf32>
    %14 = arith.mulf %11, %13 : vector<4x256xf32>
    %c1_i32 = arith.constant 1 : i32
    %15 = tpu.dynamic_rotate %1 by %c1_i32 dim 1 : vector<4x256xf32>, i32 -> vector<4x256xf32>
    %16 = vector.extract_strided_slice %2 {offsets = [3, 0], sizes = [1, 256], strides = [1, 1]} : vector<9x256xf32> to vector<1x256xf32>
    %17 = vector.broadcast %16 : vector<1x256xf32> to vector<4x256xf32>
    %18 = arith.mulf %15, %17 : vector<4x256xf32>
    %19 = vector.extract_strided_slice %2 {offsets = [4, 0], sizes = [1, 256], strides = [1, 1]} : vector<9x256xf32> to vector<1x256xf32>
    %20 = vector.broadcast %19 : vector<1x256xf32> to vector<4x256xf32>
    %21 = arith.mulf %1, %20 : vector<4x256xf32>
    %c255_i32 = arith.constant 255 : i32
    %22 = tpu.dynamic_rotate %1 by %c255_i32 dim 1 : vector<4x256xf32>, i32 -> vector<4x256xf32>
    %23 = vector.extract_strided_slice %2 {offsets = [5, 0], sizes = [1, 256], strides = [1, 1]} : vector<9x256xf32> to vector<1x256xf32>
    %24 = vector.broadcast %23 : vector<1x256xf32> to vector<4x256xf32>
    %25 = arith.mulf %22, %24 : vector<4x256xf32>
    %c241_i32 = arith.constant 241 : i32
    %26 = tpu.dynamic_rotate %1 by %c241_i32 dim 1 : vector<4x256xf32>, i32 -> vector<4x256xf32>
    %27 = vector.extract_strided_slice %2 {offsets = [6, 0], sizes = [1, 256], strides = [1, 1]} : vector<9x256xf32> to vector<1x256xf32>
    %28 = vector.broadcast %27 : vector<1x256xf32> to vector<4x256xf32>
    %29 = arith.mulf %26, %28 : vector<4x256xf32>
    %c240_i32 = arith.constant 240 : i32
    %30 = tpu.dynamic_rotate %1 by %c240_i32 dim 1 : vector<4x256xf32>, i32 -> vector<4x256xf32>
    %31 = vector.extract_strided_slice %2 {offsets = [7, 0], sizes = [1, 256], strides = [1, 1]} : vector<9x256xf32> to vector<1x256xf32>
    %32 = vector.broadcast %31 : vector<1x256xf32> to vector<4x256xf32>
    %33 = arith.mulf %30, %32 : vector<4x256xf32>
    %c239_i32 = arith.constant 239 : i32
    %34 = tpu.dynamic_rotate %1 by %c239_i32 dim 1 : vector<4x256xf32>, i32 -> vector<4x256xf32>
    %35 = vector.extract_strided_slice %2 {offsets = [8, 0], sizes = [1, 256], strides = [1, 1]} : vector<9x256xf32> to vector<1x256xf32>
    %36 = vector.broadcast %35 : vector<1x256xf32> to vector<4x256xf32>
    %37 = arith.mulf %34, %36 : vector<4x256xf32>
    %38 = tpu.concatenate %6, %10, %14, %18, %21, %25, %29, %33, %37 in 0 : vector<4x256xf32>, vector<4x256xf32>, vector<4x256xf32>, vector<4x256xf32>, vector<4x256xf32>, vector<4x256xf32>, vector<4x256xf32>, vector<4x256xf32>, vector<4x256xf32> -> vector<36x256xf32>
    %c0_4 = arith.constant 0 : index
    %c0_5 = arith.constant 0 : index
    %39 = vector.load %arg3[%c0_4, %c0_5] : memref<8x36xf32, #tpu.memory_space<vmem>>, vector<8x36xf32>
    %cst = arith.constant dense<0.000000e+00> : vector<8x256xf32>
    %40 = tpu.matmul %39, %38, %cst {dimension_numbers = #tpu.dot_dimension_numbers<[1], [0], [0], [1], [0, 0, 1, 1], [], []>} : vector<8x36xf32>, vector<36x256xf32>, vector<8x256xf32> -> vector<8x256xf32>
    %c0_6 = arith.constant 0 : index
    %c0_7 = arith.constant 0 : index
    %41 = vector.load %arg4[%c0_6, %c0_7] : memref<8x1xf32, #tpu.memory_space<vmem>>, vector<8x1xf32>
    %42 = vector.broadcast %41 : vector<8x1xf32> to vector<8x256xf32>
    %43 = arith.addf %40, %42 : vector<8x256xf32>
    %c0_8 = arith.constant 0 : index
    %c0_9 = arith.constant 0 : index
    %c0_10 = arith.constant 0 : index
    %44 = vector.load %arg5[%c0_8, %c0_9, %c0_10] : memref<1x8x256xf32, #tpu.memory_space<vmem>>, vector<1x8x256xf32>
    %45 = vector.shape_cast %44 : vector<1x8x256xf32> to vector<8x256xf32>
    %46 = vector.shape_cast %43 : vector<8x256xf32> to vector<1x8x256xf32>
    tpu.vector_store %arg5[%c0_8, %c0_9, %c0_10], %46 {strides = array<i32>} : memref<1x8x256xf32, #tpu.memory_space<vmem>>, vector<1x8x256xf32>,
    return
  }
  func.func @transform_0(%arg0: i32) -> (i32, i32, i32) {
    %c0_i32 = arith.constant 0 : i32
    %c0_i32_0 = arith.constant 0 : i32
    %c0_i32_1 = arith.constant 0 : i32
    return %arg0, %c0_i32, %c0_i32_0 : i32, i32, i32
  }
  func.func @transform_1(%arg0: i32) -> (i32, i32) {
    %c0_i32 = arith.constant 0 : i32
    %c0_i32_0 = arith.constant 0 : i32
    %c0_i32_1 = arith.constant 0 : i32
    return %c0_i32, %c0_i32_0 : i32, i32
  }
  func.func @transform_2(%arg0: i32) -> (i32, i32) {
    %c0_i32 = arith.constant 0 : i32
    %c0_i32_0 = arith.constant 0 : i32
    %c0_i32_1 = arith.constant 0 : i32
    return %c0_i32, %c0_i32_0 : i32, i32
  }
  func.func @transform_3(%arg0: i32) -> (i32, i32) {
    %c0_i32 = arith.constant 0 : i32
    %c0_i32_0 = arith.constant 0 : i32
    %c0_i32_1 = arith.constant 0 : i32
    return %c0_i32, %c0_i32_0 : i32, i32
  }
  func.func @transform_4(%arg0: i32) -> (i32, i32, i32) {
    %c0_i32 = arith.constant 0 : i32
    %c0_i32_0 = arith.constant 0 : i32
    %c0_i32_1 = arith.constant 0 : i32
    return %arg0, %c0_i32, %c0_i32_0 : i32, i32, i32
  }
}

</mosaic_0001>

<llo_original>
// kernel: tpu_custom_call.1
$region0: #{tpu_custom_call.1}
  #allocation0 [shape = 'u32[]', space=smem, size = 0x4, offset = 0x4, fixed_abs, tag = 'smem constant byte address 0x4 - core index']
  #allocation1 [shape = 'u32[144,128]{1,0:T(1,128)}', space=vmem, size = 0x12000, scoped, tag = 'internal scratch']
  %s0 = inlined_call_operand.hbm [shape: f32[2,4,256], index: 0, kind: input, shape index: {}]
  %s1 = inlined_call_operand.hbm [shape: f32[9,256], index: 1, kind: input, shape index: {}]
  %s2 = inlined_call_operand.vmem [shape: f32[8,36], index: 2, kind: input, shape index: {}]
  %s3 = inlined_call_operand.vmem [shape: f32[8,1], index: 3, kind: input, shape index: {}]
  %s4 = inlined_call_operand.hbm [shape: f32[2,8,256], index: 4, kind: output, shape index: {}]
  %s5 = sld [smem:[#allocation0]]
  $region57: #{tpu_custom_call.1} parent=0
    _
  %s7 = ssub.s32 1, %s5
  %s8 = scalar_select 0, %s7, %s5
  $region1: #{tpu_custom_call.1} parent=0
    #allocation2 [shape = 'u8[8192]{0}', space=vmem, size = 0x2000, scoped, tag = 'input window, operand 0']
    #allocation3 [shape = 's32[2]{0}', space=sflag, size = 0x8, scoped, tag = 'scoped memory for tpu_custom_call.1']
    #allocation4 [shape = 's32[2]{0}', space=sflag, size = 0x8, scoped, tag = 'scoped memory for tpu_custom_call.1']
    #allocation5 [shape = 'u8[16384]{0}', space=vmem, size = 0x4000, scoped, tag = 'input window, operand 1, single buffered']
    #allocation6 [shape = 's32[1]{0}', space=sflag, size = 0x4, scoped, tag = 'scoped memory for tpu_custom_call.1']
    #allocation7 [shape = 'u8[16384]{0}', space=vmem, size = 0x4000, scoped, tag = 'output window, operand 0']
    %9 = vsyncpa [#allocation3], 0
    %s10 = scalar_lea.sflag [#allocation3], 1
    %11 = vsyncpa %s10, 0
    %12 = vsyncpa [#allocation6], 0
    %13 = vsyncpa [#allocation4], 0
    %s14 = scalar_lea.sflag [#allocation4], 1
    %15 = vsyncpa %s14, 0
    loop: start=0, step=1, limit=4
    $region2: #{tpu_custom_call.1} parent=1 // loop_pre_header
      _
    $region3: #{tpu_custom_call.1} parent=1 // loop_header
      %s17 = sphi 0, %s21
      %p18 = scmp.ge.s32.totalorder %s17, 4
      %s27 = sphi 0, %s29
      %s30 = sphi 0, %s27
      %s31 = sphi 0, %s30
      %s47 = sphi 0, %s31
      %s51 = sphi 0, %s51
      %s53 = sphi 0, %s51
      %s54 = sphi 0, %s53
      %s68 = sphi 0, %s54
      %s72 = sphi 0, %s72
      %s74 = sphi 0, %s72
      %s75 = sphi 0, %s74
      %s89 = sphi 0, %s75
      %s93 = sphi 0, %s93
      %s95 = sphi 0, %s93
      %s96 = sphi 0, %s95
      %s110 = sphi 0, %s96
      %s116 = sphi 0, %s118
      %s119 = sphi 0, %s116
      %s120 = sphi 0, %s119
      %s136 = sphi 0, %s120
    $region4: #{tpu_custom_call.1} parent=1 // loop_header_branch
      %20 = sbr.rel (%p18) target = $region8
    $region5: #{tpu_custom_call.1} parent=1 // loop_body
      %s22 = ssub.s32 %s17, 1
      %s23 = ssub.s32 %s17, 2
      %s24 = sadd.s32 %s17, 1
      %s25 = ssub.s32 %s17, %s24
      %p26 = scmp.eq.s32.totalorder %s25, 0
      %s28 = sadd.s32 %s27, 1
      %s29 = scalar_select %p26, %s27, %s28
      %p32 = pneg %p26
      %p33 = scmp.eq.s32.totalorder %s17, 1
      %p34 = por %p32, %p33
      %p35 = scmp.ne.s32.totalorder %s27, %s30
      %p36 = scmp.eq.s32.totalorder %s17, 0
      %p37 = por %p35, %p36
      %p38 = scmp.ne.s32.totalorder %s27, %s30
      %p39 = scmp.eq.s32.totalorder %s22, 1
      %p40 = por %p38, %p39
      %p41 = scmp.ne.s32.totalorder %s30, %s31
      %p42 = scmp.eq.s32.totalorder %s22, 0
      %p43 = por %p41, %p42
      %p44 = scmp.ne.s32.totalorder %s30, %s31
      %p45 = scmp.eq.s32.totalorder %s23, 1
      %p46 = por %p44, %p45
      %p48 = scmp.ne.s32.totalorder %s31, %s47
      %p49 = scmp.eq.s32.totalorder %s23, 0
      %p50 = por %p48, %p49
      %s52 = sadd.s32 %s51, 1
      %p55 = scmp.eq.s32.totalorder %s17, 1
      %p56 = scmp.ne.s32.totalorder %s51, %s53
      %p57 = scmp.eq.s32.totalorder %s17, 0
      %p58 = por %p56, %p57
      %p59 = scmp.ne.s32.totalorder %s51, %s53
      %p60 = scmp.eq.s32.totalorder %s22, 1
      %p61 = por %p59, %p60
      %p62 = scmp.ne.s32.totalorder %s53, %s54
      %p63 = scmp.eq.s32.totalorder %s22, 0
      %p64 = por %p62, %p63
      %p65 = scmp.ne.s32.totalorder %s53, %s54
      %p66 = scmp.eq.s32.totalorder %s23, 1
      %p67 = por %p65, %p66
      %p69 = scmp.ne.s32.totalorder %s54, %s68
      %p70 = scmp.eq.s32.totalorder %s23, 0
      %p71 = por %p69, %p70
      %s73 = sadd.s32 %s72, 1
      %p76 = scmp.eq.s32.totalorder %s17, 1
      %p77 = scmp.ne.s32.totalorder %s72, %s74
      %p78 = scmp.eq.s32.totalorder %s17, 0
      %p79 = por %p77, %p78
      %p80 = scmp.ne.s32.totalorder %s72, %s74
      %p81 = scmp.eq.s32.totalorder %s22, 1
      %p82 = por %p80, %p81
      %p83 = scmp.ne.s32.totalorder %s74, %s75
      %p84 = scmp.eq.s32.totalorder %s22, 0
      %p85 = por %p83, %p84
      %p86 = scmp.ne.s32.totalorder %s74, %s75
      %p87 = scmp.eq.s32.totalorder %s23, 1
      %p88 = por %p86, %p87
      %p90 = scmp.ne.s32.totalorder %s75, %s89
      %p91 = scmp.eq.s32.totalorder %s23, 0
      %p92 = por %p90, %p91
      %s94 = sadd.s32 %s93, 1
      %p97 = scmp.eq.s32.totalorder %s17, 1
      %p98 = scmp.ne.s32.totalorder %s93, %s95
      %p99 = scmp.eq.s32.totalorder %s17, 0
      %p100 = por %p98, %p99
      %p101 = scmp.ne.s32.totalorder %s93, %s95
      %p102 = scmp.eq.s32.totalorder %s22, 1
      %p103 = por %p101, %p102
      %p104 = scmp.ne.s32.totalorder %s95, %s96
      %p105 = scmp.eq.s32.totalorder %s22, 0
      %p106 = por %p104, %p105
      %p107 = scmp.ne.s32.totalorder %s95, %s96
      %p108 = scmp.eq.s32.totalorder %s23, 1
      %p109 = por %p107, %p108
      %p111 = scmp.ne.s32.totalorder %s96, %s110
      %p112 = scmp.eq.s32.totalorder %s23, 0
      %p113 = por %p111, %p112
      %s114 = ssub.s32 %s17, %s24
      %p115 = scmp.eq.s32.totalorder %s114, 0
      %s117 = sadd.s32 %s116, 1
      %s118 = scalar_select %p115, %s116, %s117
      %p121 = pneg %p115
      %p122 = scmp.eq.s32.totalorder %s17, 1
      %p123 = por %p121, %p122
      %p124 = scmp.ne.s32.totalorder %s116, %s119
      %p125 = scmp.eq.s32.totalorder %s17, 0
      %p126 = por %p124, %p125
      %p127 = scmp.ne.s32.totalorder %s116, %s119
      %p128 = scmp.eq.s32.totalorder %s22, 1
      %p129 = por %p127, %p128
      %p130 = scmp.ne.s32.totalorder %s119, %s120
      %p131 = scmp.eq.s32.totalorder %s22, 0
      %p132 = por %p130, %p131
      %p133 = scmp.ne.s32.totalorder %s119, %s120
      %p134 = scmp.eq.s32.totalorder %s23, 1
      %p135 = por %p133, %p134
      %p137 = scmp.ne.s32.totalorder %s120, %s136
      %p138 = scmp.eq.s32.totalorder %s23, 0
      %p139 = por %p137, %p138
      %p140 = scmp.le.s32.totalorder 1, %s17
      %p141 = scmp.lt.s32.totalorder %s17, 3
      %p142 = pnand %p140, %p141
      %p143 = pneg %p142
      // Predicated region
      $region9: #{tpu_custom_call.1} parent=5 // pred_check
        _
      $region10: #{tpu_custom_call.1} parent=5 // pred_check_branch
        %145 = sbr.rel (%p142) target = $region12
      $region11: #{tpu_custom_call.1} parent=5 // pred_region
        %s146 = ssub.s32 %s17, 1
        // Predicated region
        $region13: #{tpu_custom_call.1} parent=11 // pred_check
          %p147 = pneg %p64
        $region14: #{tpu_custom_call.1} parent=11 // pred_check_branch
          %149 = sbr.rel (%p147) target = $region16
        $region15: #{tpu_custom_call.1} parent=11 // pred_region
          %s151 = ssub.s32 512, 512
          %152 = vsyncadd [#allocation6], %s151
          %s153 = sshll.u32 [#allocation5], 4
          %s154 = int_to_ptr.vmem [resolvable:$true] %s153
          %159 = dma.hbm_to_vmem [thread:$0]  %s1, 512, %s154, [#allocation6], 256, 256, 16
        $region16: #{tpu_custom_call.1} parent=11 // pred_fallthru
          _
        // Predicated region
        $region17: #{tpu_custom_call.1} parent=11 // pred_check
          %p160 = pneg %p85
        $region18: #{tpu_custom_call.1} parent=11 // pred_check_branch
          %162 = sbr.rel (%p160) target = $region20
        $region19: #{tpu_custom_call.1} parent=11 // pred_region
          _
        $region20: #{tpu_custom_call.1} parent=11 // pred_fallthru
          _
        // Predicated region
        $region21: #{tpu_custom_call.1} parent=11 // pred_check
          %p163 = pneg %p106
        $region22: #{tpu_custom_call.1} parent=11 // pred_check_branch
          %165 = sbr.rel (%p163) target = $region24
        $region23: #{tpu_custom_call.1} parent=11 // pred_region
          _
        $region24: #{tpu_custom_call.1} parent=11 // pred_fallthru
          _
      $region12: #{tpu_custom_call.1} parent=5 // pred_fallthru
        _
      %p166 = scmp.lt.s32.totalorder %s17, 2
      // Predicated region
      $region25: #{tpu_custom_call.1} parent=5 // pred_check
        %p167 = pneg %p166
      $region26: #{tpu_custom_call.1} parent=5 // pred_check_branch
        %169 = sbr.rel (%p167) target = $region28
      $region27: #{tpu_custom_call.1} parent=5 // pred_region
        // Predicated region
        $region29: #{tpu_custom_call.1} parent=27 // pred_check
          %p170 = pneg %p37
        $region30: #{tpu_custom_call.1} parent=27 // pred_check_branch
          %172 = sbr.rel (%p170) target = $region32
        $region31: #{tpu_custom_call.1} parent=27 // pred_region
          %s173 = sand.u32 %s27, 1
          %s174 = scalar_lea.sflag [#allocation3], %s173
          %s175 = sand.u32 %s27, 1
          %s176 = smul.addr %s175, 8
          %s177 = scalar_lea.vmem [#allocation2], %s176
          %s179 = ssub.s32 128, 128
          %180 = vsyncadd %s174, %s179
          %s181 = smul.addr %s17, 2
          %s182 = smul.addr %s181, 64
          %s183 = scalar_lea.hbm %s0, %s182
          %s185 = sshll.u32 %s177, 4
          %s186 = int_to_ptr.vmem [resolvable:$true] %s185
          %188 = dma.hbm_to_vmem [thread:$0]  %s183, 128, %s186, %s174
        $region32: #{tpu_custom_call.1} parent=27 // pred_fallthru
          _
      $region28: #{tpu_custom_call.1} parent=5 // pred_fallthru
        _
      %p189 = scmp.le.s32.totalorder 1, %s17
      %p190 = scmp.lt.s32.totalorder %s17, 3
      %p191 = pnand %p189, %p190
      %p192 = pneg %p191
      // Predicated region
      $region33: #{tpu_custom_call.1} parent=5 // pred_check
        _
      $region34: #{tpu_custom_call.1} parent=5 // pred_check_branch
        %194 = sbr.rel (%p191) target = $region36
      $region35: #{tpu_custom_call.1} parent=5 // pred_region
        %s195 = ssub.s32 %s17, 1
        %s196 = sand.u32 %s30, 1
        %s197 = scalar_lea.sflag [#allocation3], %s196
        %s198 = sand.u32 %s30, 1
        %s199 = smul.addr %s198, 8
        %s200 = scalar_lea.vmem [#allocation2], %s199
        // Predicated region
        $region37: #{tpu_custom_call.1} parent=35 // pred_check
          %p201 = pneg %p43
        $region38: #{tpu_custom_call.1} parent=35 // pred_check_branch
          %203 = sbr.rel (%p201) target = $region40
        $region39: #{tpu_custom_call.1} parent=35 // pred_region
          %204 = dma.done %s197, 128
        $region40: #{tpu_custom_call.1} parent=35 // pred_fallthru
          _
        // Predicated region
        $region41: #{tpu_custom_call.1} parent=35 // pred_check
          %p205 = pneg %p64
        $region42: #{tpu_custom_call.1} parent=35 // pred_check_branch
          %207 = sbr.rel (%p205) target = $region44
        $region43: #{tpu_custom_call.1} parent=35 // pred_region
          %208 = dma.done [#allocation6], 512
        $region44: #{tpu_custom_call.1} parent=35 // pred_fallthru
          _
        %s209 = sand.u32 %s30, 1
        %s210 = scalar_lea.sflag [#allocation3], %s209
        %s211 = sand.u32 %s30, 1
        %s212 = smul.addr %s211, 8
        %s213 = scalar_lea.vmem [#allocation2], %s212
        %p214 = pneg %p43
        %p215 = pneg %p40
        %p216 = pneg %p64
        %p217 = pneg %p61
        %p218 = pneg %p85
        %p219 = pneg %p82
        %p220 = pneg %p106
        %p221 = pneg %p103
        %p222 = pneg %p132
        %p223 = pneg %p129
        %s224 = sand.u32 %s119, 1
        %s225 = scalar_lea.sflag [#allocation4], %s224
        %s226 = sand.u32 %s119, 1
        %s227 = smul.addr %s226, 16
        %s228 = scalar_lea.vmem [#allocation7], %s227
        %v229 = vld [vmem:[%s200] sm:$0xff]
        %v230 = vld [vmem:[#allocation5] sm:$0xff]
        %v231 = vld [vmem:[#allocation5 + $0x8] sm:$0xff]
        %v232 = vld [vmem:[#allocation5 + $0x10] sm:$0x1]
        %v233 = vld [vmem:[#allocation5 + $0x18] sm:$0x1]
        %v235 = vcombine.high %v229, %v229
        %237 = vrot.lane.b32.xlu0 %v229, 17
        %v238 = vpop.permute.xlu0 %237
        %239 = vrot.lane.b32.xlu0 %v235, 17
        %v240 = vpop.permute.xlu0 %239
        %v241 = vlaneseq
        %v242 = vand.u32 %v241, 127
        %vm243 = vcmp.lt.s32.totalorder %v242, 17
        %v244 = vsel %vm243, %v238, %v240
        %v245 = vsel %vm243, %v240, %v238
        %v246 = vlaneseq
        %v247 = vshrl.u32 %v246, 7
        %v248 = vsub.s32 0, %v247
        %v249 = vrot.slane %v230, %v248
        %v250 = vlaneseq
        %v251 = vshrl.u32 %v250, 7
        %v252 = vsub.s32 0, %v251
        %v253 = vrot.slane %v231, %v252
        %v254 = vmul.f32 %v245, %v249
        %v255 = vmul.f32 %v244, %v253
        %256 = vrot.lane.b32.xlu0 %v229, 16
        %v257 = vpop.permute.xlu0 %256
        %258 = vrot.lane.b32.xlu0 %v235, 16
        %v259 = vpop.permute.xlu0 %258
        %vm260 = vcmp.lt.s32.totalorder %v242, 16
        %v261 = vsel %vm260, %v257, %v259
        %v262 = vsel %vm260, %v259, %v257
        %v263 = vlaneseq
        %v264 = vshrl.u32 %v263, 7
        %v265 = vsub.s32 1, %v264
        %v266 = vrot.slane %v230, %v265
        %v267 = vlaneseq
        %v268 = vshrl.u32 %v267, 7
        %v269 = vsub.s32 1, %v268
        %v270 = vrot.slane %v231, %v269
        %v271 = vmul.f32 %v262, %v266
        %v272 = vmul.f32 %v261, %v270
        %273 = vrot.lane.b32.xlu0 %v229, 15
        %v274 = vpop.permute.xlu0 %273
        %275 = vrot.lane.b32.xlu0 %v235, 15
        %v276 = vpop.permute.xlu0 %275
        %vm277 = vcmp.lt.s32.totalorder %v242, 15
        %v278 = vsel %vm277, %v274, %v276
        %v279 = vsel %vm277, %v276, %v274
        %v280 = vlaneseq
        %v281 = vshrl.u32 %v280, 7
        %v282 = vsub.s32 2, %v281
        %v283 = vrot.slane %v230, %v282
        %v284 = vlaneseq
        %v285 = vshrl.u32 %v284, 7
        %v286 = vsub.s32 2, %v285
        %v287 = vrot.slane %v231, %v286
        %v288 = vmul.f32 %v279, %v283
        %v289 = vmul.f32 %v278, %v287
        %290 = vrot.lane.b32.xlu0 %v229, 1
        %v291 = vpop.permute.xlu0 %290
        %292 = vrot.lane.b32.xlu0 %v235, 1
        %v293 = vpop.permute.xlu0 %292
        %vm294 = vcmp.lt.s32.totalorder %v242, 1
        %v295 = vsel %vm294, %v291, %v293
        %v296 = vsel %vm294, %v293, %v291
        %v297 = vlaneseq
        %v298 = vshrl.u32 %v297, 7
        %v299 = vsub.s32 3, %v298
        %v300 = vrot.slane %v230, %v299
        %v301 = vlaneseq
        %v302 = vshrl.u32 %v301, 7
        %v303 = vsub.s32 3, %v302
        %v304 = vrot.slane %v231, %v303
        %v305 = vmul.f32 %v296, %v300
        %v306 = vmul.f32 %v295, %v304
        %v307 = vlaneseq
        %v308 = vshrl.u32 %v307, 7
        %v309 = vsub.s32 4, %v308
        %v310 = vrot.slane %v230, %v309
        %v311 = vlaneseq
        %v312 = vshrl.u32 %v311, 7
        %v313 = vsub.s32 4, %v312
        %v314 = vrot.slane %v231, %v313
        %v317 = vcombine.low %v310, %v314
        %v319 = vmul.f32 %v229, %v317
        %320 = vrot.lane.b32.xlu0 %v229, 127
        %v321 = vpop.permute.xlu0 %320
        %322 = vrot.lane.b32.xlu0 %v235, 127
        %v323 = vpop.permute.xlu0 %322
        %vm324 = vcmp.lt.s32.totalorder %v242, 127
        %v325 = vsel %vm324, %v321, %v323
        %v326 = vsel %vm324, %v323, %v321
        %v327 = vlaneseq
        %v328 = vshrl.u32 %v327, 7
        %v329 = vsub.s32 5, %v328
        %v330 = vrot.slane %v230, %v329
        %v331 = vlaneseq
        %v332 = vshrl.u32 %v331, 7
        %v333 = vsub.s32 5, %v332
        %v334 = vrot.slane %v231, %v333
        %v335 = vmul.f32 %v325, %v330
        %v336 = vmul.f32 %v326, %v334
        %337 = vrot.lane.b32.xlu0 %v229, 113
        %v338 = vpop.permute.xlu0 %337
        %339 = vrot.lane.b32.xlu0 %v235, 113
        %v340 = vpop.permute.xlu0 %339
        %vm341 = vcmp.lt.s32.totalorder %v242, 113
        %v342 = vsel %vm341, %v338, %v340
        %v343 = vsel %vm341, %v340, %v338
        %v344 = vlaneseq
        %v345 = vshrl.u32 %v344, 7
        %v346 = vsub.s32 6, %v345
        %v347 = vrot.slane %v230, %v346
        %v348 = vlaneseq
        %v349 = vshrl.u32 %v348, 7
        %v350 = vsub.s32 6, %v349
        %v351 = vrot.slane %v231, %v350
        %v352 = vmul.f32 %v342, %v347
        %v353 = vmul.f32 %v343, %v351
        %354 = vrot.lane.b32.xlu0 %v229, 112
        %v355 = vpop.permute.xlu0 %354
        %356 = vrot.lane.b32.xlu0 %v235, 112
        %v357 = vpop.permute.xlu0 %356
        %vm358 = vcmp.lt.s32.totalorder %v242, 112
        %v359 = vsel %vm358, %v355, %v357
        %v360 = vsel %vm358, %v357, %v355
        %v361 = vlaneseq
        %v362 = vshrl.u32 %v361, 7
        %v363 = vsub.s32 7, %v362
        %v364 = vrot.slane %v230, %v363
        %v365 = vlaneseq
        %v366 = vshrl.u32 %v365, 7
        %v367 = vsub.s32 7, %v366
        %v368 = vrot.slane %v231, %v367
        %v369 = vmul.f32 %v359, %v364
        %v370 = vmul.f32 %v360, %v368
        %371 = vrot.lane.b32.xlu0 %v229, 111
        %v372 = vpop.permute.xlu0 %371
        %373 = vrot.lane.b32.xlu0 %v235, 111
        %v374 = vpop.permute.xlu0 %373
        %vm375 = vcmp.lt.s32.totalorder %v242, 111
        %v376 = vsel %vm375, %v372, %v374
        %v377 = vsel %vm375, %v374, %v372
        %v378 = vlaneseq
        %v379 = vshrl.u32 %v378, 7
        %v380 = vsub.s32 0, %v379
        %v381 = vrot.slane %v232, %v380
        %v382 = vlaneseq
        %v383 = vshrl.u32 %v382, 7
        %v384 = vsub.s32 0, %v383
        %v385 = vrot.slane %v233, %v384
        %v386 = vmul.f32 %v376, %v381
        %v387 = vmul.f32 %v377, %v385
        %v390 = vrot.slane %v271, 4
        %v391 = vrot.slane %v272, 4
        %v396 = vrot.slane %v305, 4
        %v397 = vrot.slane %v306, 4
        %v401 = vcombine.high %v319, %v319
        %v405 = vrot.slane %v335, 4
        %v406 = vrot.slane %v336, 4
        %v411 = vrot.slane %v369, 4
        %v412 = vrot.slane %v370, 4
        %vm415 = vcmask 1043456
        %v416 = vsel %vm415, %v254, %v390
        %v417 = vsel %vm415, %v255, %v391
        %v418 = vsel %vm415, %v288, %v396
        %v419 = vsel %vm415, %v289, %v397
        %v420 = vsel %vm415, %v319, %v405
        %v421 = vsel %vm415, %v401, %v406
        %v422 = vsel %vm415, %v352, %v411
        %v423 = vsel %vm415, %v353, %v412
        %v424 = vld [vmem:[%s2] sm:$0xff]
        %v425 = vld [vmem:[%s3] sm:$0xff]
        %427 = vset.pattern.permute.xlu0 0
        %428 = vperm.xlu0 %427, %v425
        %v429 = vpop.permute.xlu0 %428
        %vm431 = vcmask 293888
        %v433 = vsel %vm431, %v424, 0
        %v436 = vsel %vm415, %v386, 0
        %v439 = vsel %vm415, %v387, 0
        %441 = vmatprep.subr.mxu0 0.0
        %442 = vmatpush1.msra.mxu0 0.0
        %443 = vmatprep.subr.mxu0 0.0
        %444 = vmatpush1.msra.mxu0 0.0
        %445 = vmatprep.subr.mxu0 0.0
        %446 = vmatpush1.msra.mxu0 0.0
        %447 = vmatprep.subr.mxu0 0.0
        %448 = vmatpush1.msra.mxu0 0.0
        %449 = vmatprep.subr.mxu0 0.0
        %450 = vmatpush1.msra.mxu0 0.0
        %451 = vmatprep.subr.mxu0 0.0
        %452 = vmatpush1.msra.mxu0 0.0
        %453 = vmatprep.subr.mxu0 0.0
        %454 = vmatpush1.msra.mxu0 0.0
        %455 = vmatprep.subr.mxu0 0.0
        %456 = vmatpush1.msra.mxu0 0.0
        %457 = vmatprep.subr.mxu0 0.0
        %458 = vmatpush1.msra.mxu0 0.0
        %459 = vmatprep.subr.mxu0 0.0
        %460 = vmatpush1.msra.mxu0 0.0
        %461 = vmatprep.subr.mxu0 0.0
        %462 = vmatpush1.msra.mxu0 0.0
        %463 = vmatprep.subr.mxu0 %v439
        %464 = vmatpush1.msra.mxu0 %v436
        %465 = vmatprep.subr.mxu0 %v423
        %466 = vmatpush1.msra.mxu0 %v422
        %467 = vmatprep.subr.mxu0 %v421
        %468 = vmatpush1.msra.mxu0 %v420
        %469 = vmatprep.subr.mxu0 %v419
        %470 = vmatpush1.msra.mxu0 %v418
        %471 = vmatprep.subr.mxu0 %v417
        %472 = vmatpush1.msra.mxu0 %v416
        %473 = vmatprep.subr.mxu0 0.0
        %474 = vmatpush2.msra.mxu0 0.0
        %475 = vmatprep.subr.mxu0 0.0
        %476 = vmatpush2.msra.mxu0 0.0
        %477 = vmatprep.subr.mxu0 0.0
        %478 = vmatpush2.msra.mxu0 0.0
        %479 = vmatprep.subr.mxu0 0.0
        %480 = vmatpush2.msra.mxu0 0.0
        %481 = vmatprep.subr.mxu0 0.0
        %482 = vmatpush2.msra.mxu0 0.0
        %483 = vmatprep.subr.mxu0 0.0
        %484 = vmatpush2.msra.mxu0 0.0
        %485 = vmatprep.subr.mxu0 0.0
        %486 = vmatpush2.msra.mxu0 0.0
        %487 = vmatprep.subr.mxu0 0.0
        %488 = vmatpush2.msra.mxu0 0.0
        %489 = vmatprep.subr.mxu0 0.0
        %490 = vmatpush2.msra.mxu0 0.0
        %491 = vmatprep.subr.mxu0 0.0
        %492 = vmatpush2.msra.mxu0 0.0
        %493 = vmatprep.subr.mxu0 0.0
        %494 = vmatpush2.msra.mxu0 0.0
        %495 = vmatprep.subr.mxu0 0.0
        %496 = vmatpush2.msra.mxu0 0.0
        %497 = vmatprep.subr.mxu0 0.0
        %498 = vmatpush2.msra.mxu0 0.0
        %499 = vmatprep.subr.mxu0 0.0
        %500 = vmatpush2.msra.mxu0 0.0
        %501 = vmatprep.subr.mxu0 0.0
        %502 = vmatpush2.msra.mxu0 0.0
        %503 = vmatprep.subr.mxu0 0.0
        %504 = vmatpush2.msra.mxu0 0.0
        %505 = vmatprep.mubr.f32.mxu0 0.0
        %506 = vmatmul.mubr.f32.gmra.mxu0 %v433
        %v507 = vpop.f32.mrf.mxu0
        %v508 = vadd.f32 %v429, %v507
        %v509 = vpop.f32.mrf.mxu0
        %v510 = vadd.f32 %v429, %v509
        %511 = vdwg.mxu0
        %512 = vst [vmem:[%s228] sm:$0xff] %v508
        %513 = vst [vmem:[%s228 + $0x8] sm:$0xff] %v510
        %s514 = sand.u32 %s119, 1
        %s515 = scalar_lea.sflag [#allocation4], %s514
        %s516 = sand.u32 %s119, 1
        %s517 = smul.addr %s516, 16
        %s518 = scalar_lea.vmem [#allocation7], %s517
        // Predicated region
        $region45: #{tpu_custom_call.1} parent=35 // pred_check
          %p519 = pneg %p129
        $region46: #{tpu_custom_call.1} parent=35 // pred_check_branch
          %521 = sbr.rel (%p519) target = $region48
        $region47: #{tpu_custom_call.1} parent=35 // pred_region
          %s523 = ssub.s32 256, 256
          %524 = vsyncadd %s515, %s523
          %s525 = smul.addr %s22, 2
          %s526 = smul.addr %s525, 128
          %s527 = scalar_lea.hbm %s4, %s526
          %s529 = sshll.u32 %s518, 4
          %s530 = int_to_ptr.vmem [resolvable:$true] %s529
          %532 = dma.vmem_to_hbm [thread:$0]  %s530, 256, %s527, %s515
        $region48: #{tpu_custom_call.1} parent=35 // pred_fallthru
          _
      $region36: #{tpu_custom_call.1} parent=5 // pred_fallthru
        _
      %p533 = scmp.le.s32.totalorder 2, %s17
      // Predicated region
      $region49: #{tpu_custom_call.1} parent=5 // pred_check
        %p534 = pneg %p533
      $region50: #{tpu_custom_call.1} parent=5 // pred_check_branch
        %536 = sbr.rel (%p534) target = $region52
      $region51: #{tpu_custom_call.1} parent=5 // pred_region
        %s537 = ssub.s32 %s17, 2
        // Predicated region
        $region53: #{tpu_custom_call.1} parent=51 // pred_check
          %p538 = pneg %p135
        $region54: #{tpu_custom_call.1} parent=51 // pred_check_branch
          %540 = sbr.rel (%p538) target = $region56
        $region55: #{tpu_custom_call.1} parent=51 // pred_region
          %s541 = sand.u32 %s120, 1
          %s542 = scalar_lea.sflag [#allocation4], %s541
          %s543 = sand.u32 %s120, 1
          %s544 = smul.addr %s543, 16
          %s545 = scalar_lea.vmem [#allocation7], %s544
          %546 = dma.done %s542, 256
        $region56: #{tpu_custom_call.1} parent=51 // pred_fallthru
          _
      $region52: #{tpu_custom_call.1} parent=5 // pred_fallthru
        _
    $region6: #{tpu_custom_call.1} parent=1 // loop_footer
      %s21 = sadd.s32 1, %s17
    $region7: #{tpu_custom_call.1} parent=1 // loop_footer_branch
      %16 = sbr.rel target = $region3
    $region8: #{tpu_custom_call.1} parent=1 // loop_exit
      _
    %547 = vsyncpa [#allocation3], 1
    %s548 = scalar_lea.sflag [#allocation3], 1
    %549 = vsyncpa %s548, 1
    %550 = vsyncpa [#allocation6], 1
    %551 = vsyncpa [#allocation4], 1
    %s552 = scalar_lea.sflag [#allocation4], 1
    %553 = vsyncpa %s552, 1

</llo_original>
